<compile_context>
chip_gen: v5e
topology: v5e:2x2
jax: 0.10.0
libtpu: 0.0.40
codegen_flags: <defaults>
</compile_context>

<pallas_src>
import math

import jax
import jax.numpy as jnp
from jax.experimental import pallas as pl
from jax.experimental.pallas import tpu as pltpu


def _patch_merge_kernel(xe_ref, xo_ref, we_ref, wo_ref, bias_ref, o_ref):
    # xe_ref/xo_ref: (TH, Wh, 2C)   even/odd row slabs of the input
    # we_ref/wo_ref: (2C, Cout_pad) gamma-scaled rows of W^T for each slab
    # bias_ref:      (1, Cout_pad)  beta @ W^T (f32)
    # o_ref:         (TH*Wh, Cout_pad)
    th, wh, c2 = xe_ref.shape
    rows = th * wh
    inv_c4 = 1.0 / float(2 * c2)

    xe = xe_ref[...].astype(jnp.float32).reshape(rows, c2)
    xo = xo_ref[...].astype(jnp.float32).reshape(rows, c2)

    # Single-pass LayerNorm stats over the (virtual) 4C axis spanning both slabs.
    s = jnp.sum(xe, axis=-1, keepdims=True) + jnp.sum(xo, axis=-1, keepdims=True)
    ss = (jnp.sum(xe * xe, axis=-1, keepdims=True)
          + jnp.sum(xo * xo, axis=-1, keepdims=True))
    mean = s * inv_c4
    var = jnp.maximum(ss * inv_c4 - mean * mean, 0.0)
    inv = jax.lax.rsqrt(var + 1e-5)

    # gamma/beta are folded into we/wo/bias at trace time -> only normalize here.
    ye = (xe - mean) * inv
    yo = (xo - mean) * inv

    we = we_ref[...]
    wo = wo_ref[...]
    acc = jnp.dot(ye.astype(we.dtype), we, preferred_element_type=jnp.float32)
    acc = acc + jnp.dot(yo.astype(wo.dtype), wo, preferred_element_type=jnp.float32)
    acc = acc + bias_ref[...]
    o_ref[...] = acc.astype(o_ref.dtype)


def _vmem_config():
    """Return (vmem_limit_bytes, tile_budget_bytes, target_rows) per TPU gen."""
    try:
        cap = getattr(pltpu.get_tpu_info(), "vmem_capacity_bytes", None)
    except Exception:
        cap = None
    if cap is None:
        cap = 64 * 1024 * 1024                      # conservative fallback
    if cap >= 128 * 1024 * 1024:                    # v5e / v6e: 128 MiB VMEM
        limit = 64 * 1024 * 1024
        target_rows = 2048
    else:                                           # v7x: 64 MiB per TensorCore
        limit = 40 * 1024 * 1024
        target_rows = 1024
    budget = int(limit * 0.65)                      # tile budget tied to limit
    return limit, budget, target_rows


def _choose_row_tile(BH, Wh, C2, Cout_pad, x_itemsize, w_itemsize,
                     target_rows, vmem_budget):
    """Pick TH (row-pairs per grid step): ~target_rows merged pixels, fits VMEM,
    keeps the (TH*Wh, Cout) output block 8-aligned and the grid >= 2 steps."""
    def vmem_need(t):
        rows = t * Wh
        return (2 * 2 * rows * C2 * x_itemsize      # two input slabs, double-buffered
                + 2 * rows * Cout_pad * x_itemsize  # output block, double-buffered
                + 2 * C2 * Cout_pad * w_itemsize    # weight halves, single-buffered
                + Cout_pad * 4                      # bias, single-buffered
                + 6 * rows * C2 * 4)                # f32 compute temporaries (rough)

    mult = 8 // math.gcd(Wh, 8)                     # keeps TH*Wh % 8 == 0
    if BH <= mult:
        return BH                                   # full-span block: always legal
    th = max(mult, min(BH, max(1, target_rows // Wh)))
    if BH >= 2 * mult:
        th = min(th, max(mult, BH // 2))            # >= 2 grid steps (megacore)
    th = max(mult, (th // mult) * mult)             # align BEFORE budget check
    while th > mult and vmem_need(th) > vmem_budget:
        th = max(mult, ((th // 2) // mult) * mult)  # shrink, stay aligned
    return min(th, BH)


def patch_merging(x, input_resolution, gamma, beta, reduction_weight,
                  *, matmul_dtype=None):
    """x: (B, H*W, C) -> (B, (H/2)*(W/2), 2C)

    gamma, beta: (4C,) LayerNorm affine params.
    reduction_weight: (2C, 4C) -- PyTorch nn.Linear weight (out, in), no bias.
    matmul_dtype: dtype for MXU weights; default bf16 for f32/bf16 activations.
    """
    H, W = input_resolution
    B, L, C = x.shape
    assert L == H * W, "input feature has wrong size"
    assert H % 2 == 0 and W % 2 == 0, f"x size ({H}*{W}) are not even."
    Hh, Wh = H // 2, W // 2
    C2, C4, Cout = 2 * C, 4 * C, 2 * C
    BH = B * Hh
    N = BH * Wh

    # Pure reshape (no copy): [b, 2i+r, 2j+c, k] -> [(b*Hh+i), r, j, c*C+k]
    x_slabs = x.reshape(BH, 2, Wh, C2)

    # MXU dtype: bf16 by default (LN math stays f32 inside the kernel).
    if matmul_dtype is not None:
        w_dtype = jnp.dtype(matmul_dtype)
    elif x.dtype in (jnp.float32, jnp.bfloat16):
        w_dtype = jnp.dtype(jnp.bfloat16)
    else:
        w_dtype = jnp.dtype(reduction_weight.dtype)

    # Trace-time parameter prep: fold LN affine into the projection.
    #   out = ((x-mean)*inv*gamma + beta) @ W^T
    #       = ((x-mean)*inv) @ (diag(gamma) @ W^T) + beta @ W^T
    w_t = reduction_weight.T.astype(jnp.float32)                 # (4C, Cout)
    w_scaled = w_t * gamma.astype(jnp.float32)[:, None]
    bias = beta.astype(jnp.float32)[None, :] @ w_t               # (1, Cout)

    # Permute rows into natural slab order: even rows -> [x0|x2], odd -> [x1|x3]
    # (LN stats are permutation-invariant over the 4C axis).
    we = jnp.concatenate([w_scaled[0:C], w_scaled[2 * C:3 * C]], axis=0)   # (2C, Cout)
    wo = jnp.concatenate([w_scaled[C:2 * C], w_scaled[3 * C:4 * C]], axis=0)

    # Lane-dense output: pad channels to 128 only when Cout < 128.
    Cout_pad = Cout if Cout >= 128 else 128
    if Cout_pad != Cout:
        pad = Cout_pad - Cout
        we = jnp.pad(we, ((0, 0), (0, pad)))
        wo = jnp.pad(wo, ((0, 0), (0, pad)))
        bias = jnp.pad(bias, ((0, 0), (0, pad)))
    we = we.astype(w_dtype)
    wo = wo.astype(w_dtype)
    bias = bias.astype(jnp.float32)

    x_itemsize = jnp.dtype(x.dtype).itemsize
    w_itemsize = jnp.dtype(w_dtype).itemsize
    vmem_limit, tile_budget, target_rows = _vmem_config()
    th = _choose_row_tile(BH, Wh, C2, Cout_pad, x_itemsize, w_itemsize,
                          target_rows=target_rows, vmem_budget=tile_budget)
    rows = th * Wh
    grid = (pl.cdiv(BH, th),)

    cost = pl.CostEstimate(
        flops=2 * N * C4 * Cout + 8 * N * C4,
        transcendentals=N,
        bytes_accessed=(N * C4 * x_itemsize           # input read (fused gather)
                        + N * Cout_pad * x_itemsize   # output write
                        + C4 * Cout_pad * w_itemsize  # weights
                        + Cout_pad * 4),              # bias
    )

    # TODO(synk): for Wh not a multiple of 8 the in-kernel (TH,Wh,2C)->(rows,2C)
    # reshape may incur a relayout; pad Wh in the wrapper if profiles show it.
    # TODO(synk): try one merged (th, 2, Wh, 2C) input block + in-kernel parity
    # slice (single contiguous DMA/step) once lower_as_mlir confirms no relayout.
    # TODO(synk): on v5e, if xprof shows exposed input DMA, bump the two slab
    # specs to pipeline_mode=pl.Buffered(3).
    out = pl.pallas_call(
        _patch_merge_kernel,
        out_shape=jax.ShapeDtypeStruct((N, Cout_pad), x.dtype),
        grid_spec=pltpu.PrefetchScalarGridSpec(
            num_scalar_prefetch=0,
            grid=grid,
            in_specs=[
                # even-row (parity 0) and odd-row (parity 1) slabs of the SAME array
                pl.BlockSpec((th, pl.Squeezed(), Wh, C2), lambda i: (i, 0, 0, 0)),
                pl.BlockSpec((th, pl.Squeezed(), Wh, C2), lambda i: (i, 1, 0, 0)),
                # constant-index parameter blocks: single-buffered (VMEM saver)
                pl.BlockSpec((C2, Cout_pad), lambda i: (0, 0),
                             pipeline_mode=pl.Buffered(1)),
                pl.BlockSpec((C2, Cout_pad), lambda i: (0, 0),
                             pipeline_mode=pl.Buffered(1)),
                pl.BlockSpec((1, Cout_pad), lambda i: (0, 0),
                             pipeline_mode=pl.Buffered(1)),
            ],
            out_specs=pl.BlockSpec((rows, Cout_pad), lambda i: (i, 0)),
        ),
        compiler_params=pltpu.CompilerParams(
            dimension_semantics=("parallel",),        # shard grid across v7x's 2 TCs
            vmem_limit_bytes=vmem_limit,              # generation-aware
        ),
        cost_estimate=cost,
    )(x_slabs, x_slabs, we, wo, bias)

    if Cout_pad != Cout:
        out = out[:, :Cout]
    return out.reshape(B, Hh * Wh, Cout)


def _reference(x, input_resolution, gamma, beta, reduction_weight):
    H, W = input_resolution
    B, L, C = x.shape
    xv = x.reshape(B, H, W, C)
    x0 = xv[:, 0::2, 0::2, :]
    x1 = xv[:, 1::2, 0::2, :]
    x2 = xv[:, 0::2, 1::2, :]
    x3 = xv[:, 1::2, 1::2, :]
    xm = jnp.concatenate([x0, x1, x2, x3], axis=-1).reshape(B, -1, 4 * C)
    mean = jnp.mean(xm, axis=-1, keepdims=True)
    var = jnp.mean((xm - mean) ** 2, axis=-1, keepdims=True)
    xn = (xm - mean) / jnp.sqrt(var + 1e-5)
    xn = xn * gamma + beta
    return jnp.einsum("blc,oc->blo", xn, reduction_weight)


if __name__ == "__main__":
    key = jax.random.PRNGKey(0)
    k_x, k_w, k_g, k_b, k_x2 = jax.random.split(key, 5)

    B, H, W, C = 2, 16, 16, 4
    input_resolution = (H, W)

    x = jax.random.normal(k_x, (B, H * W, C), dtype=jnp.float32)
    # nn.Linear(4*dim, 2*dim, bias=False): weight shape (2C, 4C)
    reduction_weight = (
        jax.random.normal(k_w, (2 * C, 4 * C), dtype=jnp.float32) * 0.1
    )
    # nn.LayerNorm(4*dim): default ones/zeros + small perturbation
    gamma = jnp.ones((4 * C,), jnp.float32) + 0.01 * jax.random.normal(
        k_g, (4 * C,), dtype=jnp.float32
    )
    beta = 0.01 * jax.random.normal(k_b, (4 * C,), dtype=jnp.float32)

    ref = _reference(x, input_resolution, gamma, beta, reduction_weight)

    # 1) Default path: bf16 MXU weights, f32 LayerNorm math.
    out_bf16 = jax.block_until_ready(
        patch_merging(x, input_resolution, gamma, beta, reduction_weight))
    assert out_bf16.shape == (B, (H // 2) * (W // 2), 2 * C), out_bf16.shape
    assert jnp.allclose(out_bf16, ref, atol=7e-2, rtol=5e-2), (
        float(jnp.max(jnp.abs(out_bf16 - ref))))

    # 2) Explicit f32 MXU path: tight tolerance against the reference.
    out_f32 = jax.block_until_ready(
        patch_merging(x, input_resolution, gamma, beta, reduction_weight,
                      matmul_dtype=jnp.float32))
    assert jnp.allclose(out_f32, ref, atol=1e-4, rtol=1e-4), (
        float(jnp.max(jnp.abs(out_f32 - ref))))

    # 3) Tail-block path: BH not divisible by the chosen row tile.
    B3, H3, W3 = 3, 10, 16
    x3 = jax.random.normal(k_x2, (B3, H3 * W3, C), dtype=jnp.float32)
    out3 = jax.block_until_ready(
        patch_merging(x3, (H3, W3), gamma, beta, reduction_weight,
                      matmul_dtype=jnp.float32))
    ref3 = _reference(x3, (H3, W3), gamma, beta, reduction_weight)
    assert out3.shape == (B3, (H3 // 2) * (W3 // 2), 2 * C), out3.shape
    assert jnp.allclose(out3, ref3, atol=1e-4, rtol=1e-4), (
        float(jnp.max(jnp.abs(out3 - ref3))))

    print("KERNEL_OK")
</pallas_src>

<mosaic_0001>
module attributes {stable_mosaic.version = 11 : i64} {
  func.func @_patch_merge_kernel(%arg0: i32, %arg1: memref<8x1x8x8xf32, #tpu.memory_space<vmem>>, %arg2: memref<8x1x8x8xf32, #tpu.memory_space<vmem>>, %arg3: memref<8x128xbf16, #tpu.memory_space<vmem>>, %arg4: memref<8x128xbf16, #tpu.memory_space<vmem>>, %arg5: memref<1x128xf32, #tpu.memory_space<vmem>>, %arg6: memref<64x128xf32, #tpu.memory_space<vmem>>) attributes {dimension_semantics = [#tpu.dimension_semantics<parallel>], iteration_bounds = array<i64: 2>, scalar_prefetch = 0 : i64, scratch_operands = 0 : i64, tpu.core_type = #tpu.core_type<tc>, window_params = [{transform_indices = @transform_0, window_bounds = array<i64: 8, 1, 8, 8>}, {transform_indices = @transform_1, window_bounds = array<i64: 8, 1, 8, 8>}, {pipeline_mode = #tpu.pipeline_mode<synchronous>, transform_indices = @transform_2, window_bounds = array<i64: 8, 128>}, {pipeline_mode = #tpu.pipeline_mode<synchronous>, transform_indices = @transform_3, window_bounds = array<i64: 8, 128>}, {pipeline_mode = #tpu.pipeline_mode<synchronous>, transform_indices = @transform_4, window_bounds = array<i64: 1, 128>}, {transform_indices = @transform_5, window_bounds = array<i64: 64, 128>}]} {
    %c0 = arith.constant 0 : index
    %c0_0 = arith.constant 0 : index
    %c0_1 = arith.constant 0 : index
    %c0_2 = arith.constant 0 : index
    %0 = vector.load %arg1[%c0, %c0_0, %c0_1, %c0_2] : memref<8x1x8x8xf32, #tpu.memory_space<vmem>>, vector<8x1x8x8xf32>
    %1 = vector.shape_cast %0 : vector<8x1x8x8xf32> to vector<8x8x8xf32>
    %2 = vector.shape_cast %1 : vector<8x8x8xf32> to vector<64x8xf32>
    %c0_3 = arith.constant 0 : index
    %c0_4 = arith.constant 0 : index
    %c0_5 = arith.constant 0 : index
    %c0_6 = arith.constant 0 : index
    %3 = vector.load %arg2[%c0_3, %c0_4, %c0_5, %c0_6] : memref<8x1x8x8xf32, #tpu.memory_space<vmem>>, vector<8x1x8x8xf32>
    %4 = vector.shape_cast %3 : vector<8x1x8x8xf32> to vector<8x8x8xf32>
    %5 = vector.shape_cast %4 : vector<8x8x8xf32> to vector<64x8xf32>
    %cst = arith.constant dense<0.000000e+00> : vector<64xf32>
    %6 = vector.multi_reduction <add>, %2, %cst [1] : vector<64x8xf32> to vector<64xf32>
    %7 = vector.shape_cast %6 : vector<64xf32> to vector<64x1xf32>
    %cst_7 = arith.constant dense<0.000000e+00> : vector<64xf32>
    %8 = vector.multi_reduction <add>, %5, %cst_7 [1] : vector<64x8xf32> to vector<64xf32>
    %9 = vector.shape_cast %8 : vector<64xf32> to vector<64x1xf32>
    %10 = arith.addf %7, %9 : vector<64x1xf32>
    %11 = arith.mulf %2, %2 : vector<64x8xf32>
    %cst_8 = arith.constant dense<0.000000e+00> : vector<64xf32>
    %12 = vector.multi_reduction <add>, %11, %cst_8 [1] : vector<64x8xf32> to vector<64xf32>
    %13 = vector.shape_cast %12 : vector<64xf32> to vector<64x1xf32>
    %14 = arith.mulf %5, %5 : vector<64x8xf32>
    %cst_9 = arith.constant dense<0.000000e+00> : vector<64xf32>
    %15 = vector.multi_reduction <add>, %14, %cst_9 [1] : vector<64x8xf32> to vector<64xf32>
    %16 = vector.shape_cast %15 : vector<64xf32> to vector<64x1xf32>
    %17 = arith.addf %13, %16 : vector<64x1xf32>
    %cst_10 = arith.constant 6.250000e-02 : f32
    %18 = vector.broadcast %cst_10 : f32 to vector<64x1xf32>
    %19 = arith.mulf %10, %18 : vector<64x1xf32>
    %cst_11 = arith.constant 6.250000e-02 : f32
    %20 = vector.broadcast %cst_11 : f32 to vector<64x1xf32>
    %21 = arith.mulf %17, %20 : vector<64x1xf32>
    %22 = arith.mulf %19, %19 : vector<64x1xf32>
    %23 = arith.subf %21, %22 : vector<64x1xf32>
    %cst_12 = arith.constant 0.000000e+00 : f32
    %24 = vector.broadcast %cst_12 : f32 to vector<64x1xf32>
    %25 = arith.maximumf %23, %24 : vector<64x1xf32>
    %cst_13 = arith.constant 9.99999974E-6 : f32
    %26 = vector.broadcast %cst_13 : f32 to vector<64x1xf32>
    %27 = arith.addf %25, %26 : vector<64x1xf32>
    %28 = math.rsqrt %27 : vector<64x1xf32>
    %29 = vector.broadcast %19 : vector<64x1xf32> to vector<64x8xf32>
    %30 = arith.subf %2, %29 : vector<64x8xf32>
    %31 = vector.broadcast %28 : vector<64x1xf32> to vector<64x8xf32>
    %32 = arith.mulf %30, %31 : vector<64x8xf32>
    %33 = vector.broadcast %19 : vector<64x1xf32> to vector<64x8xf32>
    %34 = arith.subf %5, %33 : vector<64x8xf32>
    %35 = vector.broadcast %28 : vector<64x1xf32> to vector<64x8xf32>
    %36 = arith.mulf %34, %35 : vector<64x8xf32>
    %c0_14 = arith.constant 0 : index
    %c0_15 = arith.constant 0 : index
    %37 = vector.load %arg3[%c0_14, %c0_15] : memref<8x128xbf16, #tpu.memory_space<vmem>>, vector<8x128xbf16>
    %c0_16 = arith.constant 0 : index
    %c0_17 = arith.constant 0 : index
    %38 = vector.load %arg4[%c0_16, %c0_17] : memref<8x128xbf16, #tpu.memory_space<vmem>>, vector<8x128xbf16>
    %39 = arith.truncf %32 : vector<64x8xf32> to vector<64x8xbf16>
    %cst_18 = arith.constant dense<0.000000e+00> : vector<64x128xf32>
    %40 = tpu.matmul %39, %37, %cst_18 {dimension_numbers = #tpu.dot_dimension_numbers<[1], [0], [0], [1], [0, 0, 1, 1], [], []>} : vector<64x8xbf16>, vector<8x128xbf16>, vector<64x128xf32> -> vector<64x128xf32>
    %41 = arith.truncf %36 : vector<64x8xf32> to vector<64x8xbf16>
    %cst_19 = arith.constant dense<0.000000e+00> : vector<64x128xf32>
    %42 = tpu.matmul %41, %38, %cst_19 {dimension_numbers = #tpu.dot_dimension_numbers<[1], [0], [0], [1], [0, 0, 1, 1], [], []>} : vector<64x8xbf16>, vector<8x128xbf16>, vector<64x128xf32> -> vector<64x128xf32>
    %43 = arith.addf %40, %42 : vector<64x128xf32>
    %c0_20 = arith.constant 0 : index
    %c0_21 = arith.constant 0 : index
    %44 = vector.load %arg5[%c0_20, %c0_21] : memref<1x128xf32, #tpu.memory_space<vmem>>, vector<1x128xf32>
    %45 = vector.broadcast %44 : vector<1x128xf32> to vector<64x128xf32>
    %46 = arith.addf %43, %45 : vector<64x128xf32>
    %c0_22 = arith.constant 0 : index
    %c0_23 = arith.constant 0 : index
    %47 = vector.load %arg6[%c0_22, %c0_23] : memref<64x128xf32, #tpu.memory_space<vmem>>, vector<64x128xf32>
    tpu.vector_store %arg6[%c0_22, %c0_23], %46 {strides = array<i32>} : memref<64x128xf32, #tpu.memory_space<vmem>>, vector<64x128xf32>,
    return
  }
  func.func @transform_0(%arg0: i32) -> (i32, i32, i32, i32) {
    %c0_i32 = arith.constant 0 : i32
    %c0_i32_0 = arith.constant 0 : i32
    %c0_i32_1 = arith.constant 0 : i32
    %c0_i32_2 = arith.constant 0 : i32
    return %arg0, %c0_i32, %c0_i32_0, %c0_i32_1 : i32, i32, i32, i32
  }
  func.func @transform_1(%arg0: i32) -> (i32, i32, i32, i32) {
    %c1_i32 = arith.constant 1 : i32
    %c0_i32 = arith.constant 0 : i32
    %c0_i32_0 = arith.constant 0 : i32
    %c0_i32_1 = arith.constant 0 : i32
    return %arg0, %c1_i32, %c0_i32, %c0_i32_0 : i32, i32, i32, i32
  }
  func.func @transform_2(%arg0: i32) -> (i32, i32) {
    %c0_i32 = arith.constant 0 : i32
    %c0_i32_0 = arith.constant 0 : i32
    %c0_i32_1 = arith.constant 0 : i32
    return %c0_i32, %c0_i32_0 : i32, i32
  }
  func.func @transform_3(%arg0: i32) -> (i32, i32) {
    %c0_i32 = arith.constant 0 : i32
    %c0_i32_0 = arith.constant 0 : i32
    %c0_i32_1 = arith.constant 0 : i32
    return %c0_i32, %c0_i32_0 : i32, i32
  }
  func.func @transform_4(%arg0: i32) -> (i32, i32) {
    %c0_i32 = arith.constant 0 : i32
    %c0_i32_0 = arith.constant 0 : i32
    %c0_i32_1 = arith.constant 0 : i32
    return %c0_i32, %c0_i32_0 : i32, i32
  }
  func.func @transform_5(%arg0: i32) -> (i32, i32) {
    %c0_i32 = arith.constant 0 : i32
    %c0_i32_0 = arith.constant 0 : i32
    return %arg0, %c0_i32 : i32, i32
  }
}

</mosaic_0001>

<llo_original>
// kernel: tpu_custom_call.1
$region0: #{tpu_custom_call.1}
  #allocation0 [shape = 'u32[]', space=smem, size = 0x4, offset = 0x4, fixed_abs, tag = 'smem constant byte address 0x4 - core index']
  #allocation1 [shape = 'u32[72,128]{1,0:T(1,128)}', space=vmem, size = 0x9000, scoped, tag = 'internal scratch']
  %s0 = inlined_call_operand.vmem [shape: f32[16,2,8,8], index: 0, kind: input, shape index: {}]
  %s1 = inlined_call_operand.vmem [shape: f32[16,2,8,8], index: 1, kind: input, shape index: {}]
  %s2 = inlined_call_operand.vmem [shape: bf16[8,128], index: 2, kind: input, shape index: {}]
  %s3 = inlined_call_operand.vmem [shape: bf16[8,128], index: 3, kind: input, shape index: {}]
  %s4 = inlined_call_operand.vmem [shape: f32[1,128], index: 4, kind: input, shape index: {}]
  %s5 = inlined_call_operand.hbm [shape: f32[128,128], index: 5, kind: output, shape index: {}]
  %s6 = sld [smem:[#allocation0]]
  $region129: #{tpu_custom_call.1} parent=0
    _
  %s8 = ssub.s32 1, %s6
  %s9 = scalar_select 0, %s8, %s6
  $region1: #{tpu_custom_call.1} parent=0
    #allocation2 [shape = 'u8[65536]{0}', space=vmem, size = 0x10000, scoped, tag = 'input window, operand 0']
    #allocation3 [shape = 'u8[65536]{0}', space=vmem, size = 0x10000, scoped, tag = 'input window, operand 1']
    #allocation4 [shape = 'u8[65536]{0}', space=vmem, size = 0x10000, scoped, tag = 'output window, operand 0']
    #allocation5 [shape = 's32[2]{0}', space=sflag, size = 0x8, scoped, tag = 'scoped memory for tpu_custom_call.1']
    %10 = vsyncpa [#allocation5], 0
    %s11 = scalar_lea.sflag [#allocation5], 1
    %12 = vsyncpa %s11, 0
    loop: start=0, step=1, limit=4
    $region2: #{tpu_custom_call.1} parent=1 // loop_pre_header
      _
    $region3: #{tpu_custom_call.1} parent=1 // loop_header
      %s14 = sphi 0, %s18
      %p15 = scmp.ge.s32.totalorder %s14, 4
      %s24 = sphi 0, %s26
      %s27 = sphi 0, %s24
      %s28 = sphi 0, %s27
      %s44 = sphi 0, %s28
      %s50 = sphi 0, %s52
      %s53 = sphi 0, %s50
      %s54 = sphi 0, %s53
      %s70 = sphi 0, %s54
      %s74 = sphi 0, %s74
      %s76 = sphi 0, %s74
      %s77 = sphi 0, %s76
      %s91 = sphi 0, %s77
      %s95 = sphi 0, %s95
      %s97 = sphi 0, %s95
      %s98 = sphi 0, %s97
      %s112 = sphi 0, %s98
      %s116 = sphi 0, %s116
      %s118 = sphi 0, %s116
      %s119 = sphi 0, %s118
      %s133 = sphi 0, %s119
      %s139 = sphi 0, %s141
      %s142 = sphi 0, %s139
      %s143 = sphi 0, %s142
      %s159 = sphi 0, %s143
    $region4: #{tpu_custom_call.1} parent=1 // loop_header_branch
      %17 = sbr.rel (%p15) target = $region8
    $region5: #{tpu_custom_call.1} parent=1 // loop_body
      %s19 = ssub.s32 %s14, 1
      %s20 = ssub.s32 %s14, 2
      %s21 = sadd.s32 %s14, 1
      %s22 = ssub.s32 %s14, %s21
      %p23 = scmp.eq.s32.totalorder %s22, 0
      %s25 = sadd.s32 %s24, 1
      %s26 = scalar_select %p23, %s24, %s25
      %p29 = pneg %p23
      %p30 = scmp.eq.s32.totalorder %s14, 1
      %p31 = por %p29, %p30
      %p32 = scmp.ne.s32.totalorder %s24, %s27
      %p33 = scmp.eq.s32.totalorder %s14, 0
      %p34 = por %p32, %p33
      %p35 = scmp.ne.s32.totalorder %s24, %s27
      %p36 = scmp.eq.s32.totalorder %s19, 1
      %p37 = por %p35, %p36
      %p38 = scmp.ne.s32.totalorder %s27, %s28
      %p39 = scmp.eq.s32.totalorder %s19, 0
      %p40 = por %p38, %p39
      %p41 = scmp.ne.s32.totalorder %s27, %s28
      %p42 = scmp.eq.s32.totalorder %s20, 1
      %p43 = por %p41, %p42
      %p45 = scmp.ne.s32.totalorder %s28, %s44
      %p46 = scmp.eq.s32.totalorder %s20, 0
      %p47 = por %p45, %p46
      %s48 = ssub.s32 %s14, %s21
      %p49 = scmp.eq.s32.totalorder %s48, 0
      %s51 = sadd.s32 %s50, 1
      %s52 = scalar_select %p49, %s50, %s51
      %p55 = pneg %p49
      %p56 = scmp.eq.s32.totalorder %s14, 1
      %p57 = por %p55, %p56
      %p58 = scmp.ne.s32.totalorder %s50, %s53
      %p59 = scmp.eq.s32.totalorder %s14, 0
      %p60 = por %p58, %p59
      %p61 = scmp.ne.s32.totalorder %s50, %s53
      %p62 = scmp.eq.s32.totalorder %s19, 1
      %p63 = por %p61, %p62
      %p64 = scmp.ne.s32.totalorder %s53, %s54
      %p65 = scmp.eq.s32.totalorder %s19, 0
      %p66 = por %p64, %p65
      %p67 = scmp.ne.s32.totalorder %s53, %s54
      %p68 = scmp.eq.s32.totalorder %s20, 1
      %p69 = por %p67, %p68
      %p71 = scmp.ne.s32.totalorder %s54, %s70
      %p72 = scmp.eq.s32.totalorder %s20, 0
      %p73 = por %p71, %p72
      %s75 = sadd.s32 %s74, 1
      %p78 = scmp.eq.s32.totalorder %s14, 1
      %p79 = scmp.ne.s32.totalorder %s74, %s76
      %p80 = scmp.eq.s32.totalorder %s14, 0
      %p81 = por %p79, %p80
      %p82 = scmp.ne.s32.totalorder %s74, %s76
      %p83 = scmp.eq.s32.totalorder %s19, 1
      %p84 = por %p82, %p83
      %p85 = scmp.ne.s32.totalorder %s76, %s77
      %p86 = scmp.eq.s32.totalorder %s19, 0
      %p87 = por %p85, %p86
      %p88 = scmp.ne.s32.totalorder %s76, %s77
      %p89 = scmp.eq.s32.totalorder %s20, 1
      %p90 = por %p88, %p89
      %p92 = scmp.ne.s32.totalorder %s77, %s91
      %p93 = scmp.eq.s32.totalorder %s20, 0
      %p94 = por %p92, %p93
      %s96 = sadd.s32 %s95, 1
      %p99 = scmp.eq.s32.totalorder %s14, 1
      %p100 = scmp.ne.s32.totalorder %s95, %s97
      %p101 = scmp.eq.s32.totalorder %s14, 0
      %p102 = por %p100, %p101
      %p103 = scmp.ne.s32.totalorder %s95, %s97
      %p104 = scmp.eq.s32.totalorder %s19, 1
      %p105 = por %p103, %p104
      %p106 = scmp.ne.s32.totalorder %s97, %s98
      %p107 = scmp.eq.s32.totalorder %s19, 0
      %p108 = por %p106, %p107
      %p109 = scmp.ne.s32.totalorder %s97, %s98
      %p110 = scmp.eq.s32.totalorder %s20, 1
      %p111 = por %p109, %p110
      %p113 = scmp.ne.s32.totalorder %s98, %s112
      %p114 = scmp.eq.s32.totalorder %s20, 0
      %p115 = por %p113, %p114
      %s117 = sadd.s32 %s116, 1
      %p120 = scmp.eq.s32.totalorder %s14, 1
      %p121 = scmp.ne.s32.totalorder %s116, %s118
      %p122 = scmp.eq.s32.totalorder %s14, 0
      %p123 = por %p121, %p122
      %p124 = scmp.ne.s32.totalorder %s116, %s118
      %p125 = scmp.eq.s32.totalorder %s19, 1
      %p126 = por %p124, %p125
      %p127 = scmp.ne.s32.totalorder %s118, %s119
      %p128 = scmp.eq.s32.totalorder %s19, 0
      %p129 = por %p127, %p128
      %p130 = scmp.ne.s32.totalorder %s118, %s119
      %p131 = scmp.eq.s32.totalorder %s20, 1
      %p132 = por %p130, %p131
      %p134 = scmp.ne.s32.totalorder %s119, %s133
      %p135 = scmp.eq.s32.totalorder %s20, 0
      %p136 = por %p134, %p135
      %s137 = ssub.s32 %s14, %s21
      %p138 = scmp.eq.s32.totalorder %s137, 0
      %s140 = sadd.s32 %s139, 1
      %s141 = scalar_select %p138, %s139, %s140
      %p144 = pneg %p138
      %p145 = scmp.eq.s32.totalorder %s14, 1
      %p146 = por %p144, %p145
      %p147 = scmp.ne.s32.totalorder %s139, %s142
      %p148 = scmp.eq.s32.totalorder %s14, 0
      %p149 = por %p147, %p148
      %p150 = scmp.ne.s32.totalorder %s139, %s142
      %p151 = scmp.eq.s32.totalorder %s19, 1
      %p152 = por %p150, %p151
      %p153 = scmp.ne.s32.totalorder %s142, %s143
      %p154 = scmp.eq.s32.totalorder %s19, 0
      %p155 = por %p153, %p154
      %p156 = scmp.ne.s32.totalorder %s142, %s143
      %p157 = scmp.eq.s32.totalorder %s20, 1
      %p158 = por %p156, %p157
      %p160 = scmp.ne.s32.totalorder %s143, %s159
      %p161 = scmp.eq.s32.totalorder %s20, 0
      %p162 = por %p160, %p161
      %p163 = scmp.le.s32.totalorder 1, %s14
      %p164 = scmp.lt.s32.totalorder %s14, 3
      %p165 = pnand %p163, %p164
      %p166 = pneg %p165
      // Predicated region
      $region9: #{tpu_custom_call.1} parent=5 // pred_check
        _
      $region10: #{tpu_custom_call.1} parent=5 // pred_check_branch
        %168 = sbr.rel (%p165) target = $region12
      $region11: #{tpu_custom_call.1} parent=5 // pred_region
        %s169 = ssub.s32 %s14, 1
        // Predicated region
        $region13: #{tpu_custom_call.1} parent=11 // pred_check
          %p170 = pneg %p87
        $region14: #{tpu_custom_call.1} parent=11 // pred_check_branch
          %172 = sbr.rel (%p170) target = $region16
        $region15: #{tpu_custom_call.1} parent=11 // pred_region
          _
        $region16: #{tpu_custom_call.1} parent=11 // pred_fallthru
          _
        // Predicated region
        $region17: #{tpu_custom_call.1} parent=11 // pred_check
          %p173 = pneg %p108
        $region18: #{tpu_custom_call.1} parent=11 // pred_check_branch
          %175 = sbr.rel (%p173) target = $region20
        $region19: #{tpu_custom_call.1} parent=11 // pred_region
          _
        $region20: #{tpu_custom_call.1} parent=11 // pred_fallthru
          _
        // Predicated region
        $region21: #{tpu_custom_call.1} parent=11 // pred_check
          %p176 = pneg %p129
        $region22: #{tpu_custom_call.1} parent=11 // pred_check_branch
          %178 = sbr.rel (%p176) target = $region24
        $region23: #{tpu_custom_call.1} parent=11 // pred_region
          _
        $region24: #{tpu_custom_call.1} parent=11 // pred_fallthru
          _
      $region12: #{tpu_custom_call.1} parent=5 // pred_fallthru
        _
      %p179 = scmp.lt.s32.totalorder %s14, 2
      // Predicated region
      $region25: #{tpu_custom_call.1} parent=5 // pred_check
        %p180 = pneg %p179
      $region26: #{tpu_custom_call.1} parent=5 // pred_check_branch
        %182 = sbr.rel (%p180) target = $region28
      $region27: #{tpu_custom_call.1} parent=5 // pred_region
        // Predicated region
        $region29: #{tpu_custom_call.1} parent=27 // pred_check
          %p183 = pneg %p34
        $region30: #{tpu_custom_call.1} parent=27 // pred_check_branch
          %185 = sbr.rel (%p183) target = $region32
        $region31: #{tpu_custom_call.1} parent=27 // pred_region
          %s186 = sand.u32 %s24, 1
          %s187 = sand.u32 %s24, 1
          %s188 = smul.addr %s187, 64
          %s189 = scalar_lea.vmem [#allocation2], %s188
          %s190 = smul.u32 8, %s14
          %s191 = smul.addr %s190, 2
          %s192 = smul.addr %s191, 8
          %s193 = scalar_lea.vmem %s0, %s192
          // Predicated region
          $region33: #{tpu_custom_call.1} parent=31 // pred_check
            _
          $region34: #{tpu_custom_call.1} parent=31 // pred_check_branch
            %195 = sbr.rel (0) target = $region36
          $region35: #{tpu_custom_call.1} parent=31 // pred_region
            // Predicated region
            $region37: #{tpu_custom_call.1} parent=35 // pred_check
              _
            $region38: #{tpu_custom_call.1} parent=35 // pred_check_branch
              %197 = sbr.rel (0) target = $region40
            $region39: #{tpu_custom_call.1} parent=35 // pred_region
              // Predicated region
              $region52: #{tpu_custom_call.1} parent=39 // pred_check
                _
              $region53: #{tpu_custom_call.1} parent=39 // pred_check_branch
                %227 = sbr.rel (0) target = $region55
              $region54: #{tpu_custom_call.1} parent=39 // pred_region
                loop: start=0, step=1, limit=1
                $region56: #{tpu_custom_call.1} parent=54 // loop_pre_header
                  _
                $region57: #{tpu_custom_call.1} parent=54 // loop_header
                  %s229 = sphi 0, %s233
                  %p230 = scmp.ge.s32.totalorder %s229, 1
                  %s234 = sphi %s193, %s193
                  %s235 = sphi %s189, %s189
                $region58: #{tpu_custom_call.1} parent=54 // loop_header_branch
                  %232 = sbr.rel (%p230) target = $region62
                $region59: #{tpu_custom_call.1} parent=54 // loop_body
                  %v236 = vld [vmem:[%s234] sm:$0xff]
                  %237 = vst [vmem:[%s235] sm:$0xff] %v236
                  %v238 = vld [vmem:[%s234 + $0x10] sm:$0xff]
                  %239 = vst [vmem:[%s235 + $0x8] sm:$0xff] %v238
                  %v240 = vld [vmem:[%s234 + $0x20] sm:$0xff]
                  %241 = vst [vmem:[%s235 + $0x10] sm:$0xff] %v240
                  %v242 = vld [vmem:[%s234 + $0x30] sm:$0xff]
                  %243 = vst [vmem:[%s235 + $0x18] sm:$0xff] %v242
                  %v244 = vld [vmem:[%s234 + $0x40] sm:$0xff]
                  %245 = vst [vmem:[%s235 + $0x20] sm:$0xff] %v244
                  %v246 = vld [vmem:[%s234 + $0x50] sm:$0xff]
                  %247 = vst [vmem:[%s235 + $0x28] sm:$0xff] %v246
                  %v248 = vld [vmem:[%s234 + $0x60] sm:$0xff]
                  %249 = vst [vmem:[%s235 + $0x30] sm:$0xff] %v248
                  %v250 = vld [vmem:[%s234 + $0x70] sm:$0xff]
                  %251 = vst [vmem:[%s235 + $0x38] sm:$0xff] %v250
                $region60: #{tpu_custom_call.1} parent=54 // loop_footer
                  %s233 = sadd.s32 1, %s229
                $region61: #{tpu_custom_call.1} parent=54 // loop_footer_branch
                  %228 = sbr.rel target = $region57
                $region62: #{tpu_custom_call.1} parent=54 // loop_exit
                  _
              $region55: #{tpu_custom_call.1} parent=39 // pred_fallthru
                _
              // Predicated region
              $region63: #{tpu_custom_call.1} parent=39 // pred_check
                _
              $region64: #{tpu_custom_call.1} parent=39 // pred_check_branch
                %253 = sbr.rel target = $region66
              $region65: #{tpu_custom_call.1} parent=39 // pred_region
                _
              $region66: #{tpu_custom_call.1} parent=39 // pred_fallthru
                _
            $region40: #{tpu_custom_call.1} parent=35 // pred_fallthru
              _
            // Predicated region
            $region41: #{tpu_custom_call.1} parent=35 // pred_check
              _
            $region42: #{tpu_custom_call.1} parent=35 // pred_check_branch
              %199 = sbr.rel target = $region44
            $region43: #{tpu_custom_call.1} parent=35 // pred_region
              %s201 = ssub.s32 256, 1
              loop: start=0, step=1, limit=1
              $region45: #{tpu_custom_call.1} parent=43 // loop_pre_header
                _
              $region46: #{tpu_custom_call.1} parent=43 // loop_header
                %s203 = sphi 0, %s207
                %p204 = scmp.ge.s32.totalorder %s203, 1
                %s208 = sphi %s193, %s193
                %s209 = sphi %s189, %s189
              $region47: #{tpu_custom_call.1} parent=43 // loop_header_branch
                %206 = sbr.rel (%p204) target = $region51
              $region48: #{tpu_custom_call.1} parent=43 // loop_body
                %v210 = vld [vmem:[%s208] sm:%s201]
                %211 = vst [vmem:[%s209] sm:%s201] %v210
                %v212 = vld [vmem:[%s208 + $0x10] sm:%s201]
                %213 = vst [vmem:[%s209 + $0x8] sm:%s201] %v212
                %v214 = vld [vmem:[%s208 + $0x20] sm:%s201]
                %215 = vst [vmem:[%s209 + $0x10] sm:%s201] %v214
                %v216 = vld [vmem:[%s208 + $0x30] sm:%s201]
                %217 = vst [vmem:[%s209 + $0x18] sm:%s201] %v216
                %v218 = vld [vmem:[%s208 + $0x40] sm:%s201]
                %219 = vst [vmem:[%s209 + $0x20] sm:%s201] %v218
                %v220 = vld [vmem:[%s208 + $0x50] sm:%s201]
                %221 = vst [vmem:[%s209 + $0x28] sm:%s201] %v220
                %v222 = vld [vmem:[%s208 + $0x60] sm:%s201]
                %223 = vst [vmem:[%s209 + $0x30] sm:%s201] %v222
                %v224 = vld [vmem:[%s208 + $0x70] sm:%s201]
                %225 = vst [vmem:[%s209 + $0x38] sm:%s201] %v224
              $region49: #{tpu_custom_call.1} parent=43 // loop_footer
                %s207 = sadd.s32 1, %s203
              $region50: #{tpu_custom_call.1} parent=43 // loop_footer_branch
                %202 = sbr.rel target = $region46
              $region51: #{tpu_custom_call.1} parent=43 // loop_exit
                _
            $region44: #{tpu_custom_call.1} parent=35 // pred_fallthru
              _
          $region36: #{tpu_custom_call.1} parent=31 // pred_fallthru
            _
          %254 = vnop
        $region32: #{tpu_custom_call.1} parent=27 // pred_fallthru
          _
        // Predicated region
        $region67: #{tpu_custom_call.1} parent=27 // pred_check
          %p255 = pneg %p60
        $region68: #{tpu_custom_call.1} parent=27 // pred_check_branch
          %257 = sbr.rel (%p255) target = $region70
        $region69: #{tpu_custom_call.1} parent=27 // pred_region
          %s258 = sand.u32 %s50, 1
          %s259 = sand.u32 %s50, 1
          %s260 = smul.addr %s259, 64
          %s261 = scalar_lea.vmem [#allocation3], %s260
          %s262 = smul.u32 8, %s14
          %s263 = smul.addr %s262, 2
          %s264 = sadd.s32 1, %s263
          %s265 = smul.addr %s264, 8
          %s266 = scalar_lea.vmem %s1, %s265
          // Predicated region
          $region71: #{tpu_custom_call.1} parent=69 // pred_check
            _
          $region72: #{tpu_custom_call.1} parent=69 // pred_check_branch
            %268 = sbr.rel (0) target = $region74
          $region73: #{tpu_custom_call.1} parent=69 // pred_region
            // Predicated region
            $region75: #{tpu_custom_call.1} parent=73 // pred_check
              _
            $region76: #{tpu_custom_call.1} parent=73 // pred_check_branch
              %270 = sbr.rel (0) target = $region78
            $region77: #{tpu_custom_call.1} parent=73 // pred_region
              // Predicated region
              $region90: #{tpu_custom_call.1} parent=77 // pred_check
                _
              $region91: #{tpu_custom_call.1} parent=77 // pred_check_branch
                %300 = sbr.rel (0) target = $region93
              $region92: #{tpu_custom_call.1} parent=77 // pred_region
                loop: start=0, step=1, limit=1
                $region94: #{tpu_custom_call.1} parent=92 // loop_pre_header
                  _
                $region95: #{tpu_custom_call.1} parent=92 // loop_header
                  %s302 = sphi 0, %s306
                  %p303 = scmp.ge.s32.totalorder %s302, 1
                  %s307 = sphi %s266, %s266
                  %s308 = sphi %s261, %s261
                $region96: #{tpu_custom_call.1} parent=92 // loop_header_branch
                  %305 = sbr.rel (%p303) target = $region100
                $region97: #{tpu_custom_call.1} parent=92 // loop_body
                  %v309 = vld [vmem:[%s307] sm:$0xff]
                  %310 = vst [vmem:[%s308] sm:$0xff] %v309
                  %v311 = vld [vmem:[%s307 + $0x10] sm:$0xff]
                  %312 = vst [vmem:[%s308 + $0x8] sm:$0xff] %v311
                  %v313 = vld [vmem:[%s307 + $0x20] sm:$0xff]
                  %314 = vst [vmem:[%s308 + $0x10] sm:$0xff] %v313
                  %v315 = vld [vmem:[%s307 + $0x30] sm:$0xff]
                  %316 = vst [vmem:[%s308 + $0x18] sm:$0xff] %v315
                  %v317 = vld [vmem:[%s307 + $0x40] sm:$0xff]
                  %318 = vst [vmem:[%s308 + $0x20] sm:$0xff] %v317
                  %v319 = vld [vmem:[%s307 + $0x50] sm:$0xff]
                  %320 = vst [vmem:[%s308 + $0x28] sm:$0xff] %v319
                  %v321 = vld [vmem:[%s307 + $0x60] sm:$0xff]
                  %322 = vst [vmem:[%s308 + $0x30] sm:$0xff] %v321
                  %v323 = vld [vmem:[%s307 + $0x70] sm:$0xff]
                  %324 = vst [vmem:[%s308 + $0x38] sm:$0xff] %v323
                $region98: #{tpu_custom_call.1} parent=92 // loop_footer
                  %s306 = sadd.s32 1, %s302
                $region99: #{tpu_custom_call.1} parent=92 // loop_footer_branch
                  %301 = sbr.rel target = $region95
                $region100: #{tpu_custom_call.1} parent=92 // loop_exit
                  _
              $region93: #{tpu_custom_call.1} parent=77 // pred_fallthru
                _
              // Predicated region
              $region101: #{tpu_custom_call.1} parent=77 // pred_check
                _
              $region102: #{tpu_custom_call.1} parent=77 // pred_check_branch
                %326 = sbr.rel target = $region104
              $region103: #{tpu_custom_call.1} parent=77 // pred_region
                _
              $region104: #{tpu_custom_call.1} parent=77 // pred_fallthru
                _
            $region78: #{tpu_custom_call.1} parent=73 // pred_fallthru
              _
            // Predicated region
            $region79: #{tpu_custom_call.1} parent=73 // pred_check
              _
            $region80: #{tpu_custom_call.1} parent=73 // pred_check_branch
              %272 = sbr.rel target = $region82
            $region81: #{tpu_custom_call.1} parent=73 // pred_region
              %s274 = ssub.s32 256, 1
              loop: start=0, step=1, limit=1
              $region83: #{tpu_custom_call.1} parent=81 // loop_pre_header
                _
              $region84: #{tpu_custom_call.1} parent=81 // loop_header
                %s276 = sphi 0, %s280
                %p277 = scmp.ge.s32.totalorder %s276, 1
                %s281 = sphi %s266, %s266
                %s282 = sphi %s261, %s261
              $region85: #{tpu_custom_call.1} parent=81 // loop_header_branch
                %279 = sbr.rel (%p277) target = $region89
              $region86: #{tpu_custom_call.1} parent=81 // loop_body
                %v283 = vld [vmem:[%s281] sm:%s274]
                %284 = vst [vmem:[%s282] sm:%s274] %v283
                %v285 = vld [vmem:[%s281 + $0x10] sm:%s274]
                %286 = vst [vmem:[%s282 + $0x8] sm:%s274] %v285
                %v287 = vld [vmem:[%s281 + $0x20] sm:%s274]
                %288 = vst [vmem:[%s282 + $0x10] sm:%s274] %v287
                %v289 = vld [vmem:[%s281 + $0x30] sm:%s274]
                %290 = vst [vmem:[%s282 + $0x18] sm:%s274] %v289
                %v291 = vld [vmem:[%s281 + $0x40] sm:%s274]
                %292 = vst [vmem:[%s282 + $0x20] sm:%s274] %v291
                %v293 = vld [vmem:[%s281 + $0x50] sm:%s274]
                %294 = vst [vmem:[%s282 + $0x28] sm:%s274] %v293
                %v295 = vld [vmem:[%s281 + $0x60] sm:%s274]
                %296 = vst [vmem:[%s282 + $0x30] sm:%s274] %v295
                %v297 = vld [vmem:[%s281 + $0x70] sm:%s274]
                %298 = vst [vmem:[%s282 + $0x38] sm:%s274] %v297
              $region87: #{tpu_custom_call.1} parent=81 // loop_footer
                %s280 = sadd.s32 1, %s276
              $region88: #{tpu_custom_call.1} parent=81 // loop_footer_branch
                %275 = sbr.rel target = $region84
              $region89: #{tpu_custom_call.1} parent=81 // loop_exit
                _
            $region82: #{tpu_custom_call.1} parent=73 // pred_fallthru
              _
          $region74: #{tpu_custom_call.1} parent=69 // pred_fallthru
            _
          %327 = vnop
        $region70: #{tpu_custom_call.1} parent=27 // pred_fallthru
          _
      $region28: #{tpu_custom_call.1} parent=5 // pred_fallthru
        _
      %p328 = scmp.le.s32.totalorder 1, %s14
      %p329 = scmp.lt.s32.totalorder %s14, 3
      %p330 = pnand %p328, %p329
      %p331 = pneg %p330
      // Predicated region
      $region105: #{tpu_custom_call.1} parent=5 // pred_check
        _
      $region106: #{tpu_custom_call.1} parent=5 // pred_check_branch
        %333 = sbr.rel (%p330) target = $region108
      $region107: #{tpu_custom_call.1} parent=5 // pred_region
        %s334 = ssub.s32 %s14, 1
        %s335 = sand.u32 %s27, 1
        %s336 = sand.u32 %s27, 1
        %s337 = smul.addr %s336, 64
        %s338 = scalar_lea.vmem [#allocation2], %s337
        // Predicated region
        $region109: #{tpu_custom_call.1} parent=107 // pred_check
          %p339 = pneg %p40
        $region110: #{tpu_custom_call.1} parent=107 // pred_check_branch
          %341 = sbr.rel (%p339) target = $region112
        $region111: #{tpu_custom_call.1} parent=107 // pred_region
          _
        $region112: #{tpu_custom_call.1} parent=107 // pred_fallthru
          _
        %s342 = sand.u32 %s53, 1
        %s343 = sand.u32 %s53, 1
        %s344 = smul.addr %s343, 64
        %s345 = scalar_lea.vmem [#allocation3], %s344
        // Predicated region
        $region113: #{tpu_custom_call.1} parent=107 // pred_check
          %p346 = pneg %p66
        $region114: #{tpu_custom_call.1} parent=107 // pred_check_branch
          %348 = sbr.rel (%p346) target = $region116
        $region115: #{tpu_custom_call.1} parent=107 // pred_region
          _
        $region116: #{tpu_custom_call.1} parent=107 // pred_fallthru
          _
        %s349 = sand.u32 %s27, 1
        %s350 = sand.u32 %s27, 1
        %s351 = smul.addr %s350, 64
        %s352 = scalar_lea.vmem [#allocation2], %s351
        %p353 = pneg %p40
        %p354 = pneg %p37
        %s355 = sand.u32 %s53, 1
        %s356 = sand.u32 %s53, 1
        %s357 = smul.addr %s356, 64
        %s358 = scalar_lea.vmem [#allocation3], %s357
        %p359 = pneg %p66
        %p360 = pneg %p63
        %p361 = pneg %p87
        %p362 = pneg %p84
        %p363 = pneg %p108
        %p364 = pneg %p105
        %p365 = pneg %p129
        %p366 = pneg %p126
        %p367 = pneg %p155
        %p368 = pneg %p152
        %s369 = sand.u32 %s142, 1
        %s370 = scalar_lea.sflag [#allocation5], %s369
        %s371 = sand.u32 %s142, 1
        %s372 = smul.addr %s371, 64
        %s373 = scalar_lea.vmem [#allocation4], %s372
        %s374 = smul.u32 8, %s19
        %s375 = smul.u32 8, %s19
        %s376 = smul.u32 8, %s19
        %v378 = vld [vmem:[%s338] sm:$0xff]
        %v379 = vld [vmem:[%s338 + $0x8] sm:$0xff]
        %v380 = vld [vmem:[%s338 + $0x10] sm:$0xff]
        %v381 = vld [vmem:[%s338 + $0x18] sm:$0xff]
        %v382 = vld [vmem:[%s338 + $0x20] sm:$0xff]
        %v383 = vld [vmem:[%s338 + $0x28] sm:$0xff]
        %v384 = vld [vmem:[%s338 + $0x30] sm:$0xff]
        %v385 = vld [vmem:[%s338 + $0x38] sm:$0xff]
        %v386 = vld [vmem:[%s345] sm:$0xff]
        %v387 = vld [vmem:[%s345 + $0x8] sm:$0xff]
        %v388 = vld [vmem:[%s345 + $0x10] sm:$0xff]
        %v389 = vld [vmem:[%s345 + $0x18] sm:$0xff]
        %v390 = vld [vmem:[%s345 + $0x20] sm:$0xff]
        %v391 = vld [vmem:[%s345 + $0x28] sm:$0xff]
        %v392 = vld [vmem:[%s345 + $0x30] sm:$0xff]
        %v393 = vld [vmem:[%s345 + $0x38] sm:$0xff]
        %vm394 = vcmask 64512
        %v395 = vsel %vm394, %v378, 0.0
        %396 = vadd.xlane.f32.xlu0 %v395
        %v397 = vpop.xlane.xlu0 %396
        %v398 = vsel %vm394, %v379, 0.0
        %399 = vadd.xlane.f32.xlu0 %v398
        %v400 = vpop.xlane.xlu0 %399
        %v401 = vsel %vm394, %v380, 0.0
        %402 = vadd.xlane.f32.xlu0 %v401
        %v403 = vpop.xlane.xlu0 %402
        %v404 = vsel %vm394, %v381, 0.0
        %405 = vadd.xlane.f32.xlu0 %v404
        %v406 = vpop.xlane.xlu0 %405
        %v407 = vsel %vm394, %v382, 0.0
        %408 = vadd.xlane.f32.xlu0 %v407
        %v409 = vpop.xlane.xlu0 %408
        %v410 = vsel %vm394, %v383, 0.0
        %411 = vadd.xlane.f32.xlu0 %v410
        %v412 = vpop.xlane.xlu0 %411
        %v413 = vsel %vm394, %v384, 0.0
        %414 = vadd.xlane.f32.xlu0 %v413
        %v415 = vpop.xlane.xlu0 %414
        %v416 = vsel %vm394, %v385, 0.0
        %417 = vadd.xlane.f32.xlu0 %v416
        %v418 = vpop.xlane.xlu0 %417
        %v419 = vsel %vm394, %v386, 0.0
        %420 = vadd.xlane.f32.xlu0 %v419
        %v421 = vpop.xlane.xlu0 %420
        %v422 = vsel %vm394, %v387, 0.0
        %423 = vadd.xlane.f32.xlu0 %v422
        %v424 = vpop.xlane.xlu0 %423
        %v425 = vsel %vm394, %v388, 0.0
        %426 = vadd.xlane.f32.xlu0 %v425
        %v427 = vpop.xlane.xlu0 %426
        %v428 = vsel %vm394, %v389, 0.0
        %429 = vadd.xlane.f32.xlu0 %v428
        %v430 = vpop.xlane.xlu0 %429
        %v431 = vsel %vm394, %v390, 0.0
        %432 = vadd.xlane.f32.xlu0 %v431
        %v433 = vpop.xlane.xlu0 %432
        %v434 = vsel %vm394, %v391, 0.0
        %435 = vadd.xlane.f32.xlu0 %v434
        %v436 = vpop.xlane.xlu0 %435
        %v437 = vsel %vm394, %v392, 0.0
        %438 = vadd.xlane.f32.xlu0 %v437
        %v439 = vpop.xlane.xlu0 %438
        %v440 = vsel %vm394, %v393, 0.0
        %441 = vadd.xlane.f32.xlu0 %v440
        %v442 = vpop.xlane.xlu0 %441
        %v443 = vadd.f32 %v397, %v421
        %v444 = vadd.f32 %v400, %v424
        %v445 = vadd.f32 %v403, %v427
        %v446 = vadd.f32 %v406, %v430
        %v447 = vadd.f32 %v409, %v433
        %v448 = vadd.f32 %v412, %v436
        %v449 = vadd.f32 %v415, %v439
        %v450 = vadd.f32 %v418, %v442
        %v451 = vmul.f32 %v378, %v378
        %v452 = vmul.f32 %v379, %v379
        %v453 = vmul.f32 %v380, %v380
        %v454 = vmul.f32 %v381, %v381
        %v455 = vmul.f32 %v382, %v382
        %v456 = vmul.f32 %v383, %v383
        %v457 = vmul.f32 %v384, %v384
        %v458 = vmul.f32 %v385, %v385
        %v459 = vsel %vm394, %v451, 0.0
        %460 = vadd.xlane.f32.xlu0 %v459
        %v461 = vpop.xlane.xlu0 %460
        %v462 = vsel %vm394, %v452, 0.0
        %463 = vadd.xlane.f32.xlu0 %v462
        %v464 = vpop.xlane.xlu0 %463
        %v465 = vsel %vm394, %v453, 0.0
        %466 = vadd.xlane.f32.xlu0 %v465
        %v467 = vpop.xlane.xlu0 %466
        %v468 = vsel %vm394, %v454, 0.0
        %469 = vadd.xlane.f32.xlu0 %v468
        %v470 = vpop.xlane.xlu0 %469
        %v471 = vsel %vm394, %v455, 0.0
        %472 = vadd.xlane.f32.xlu0 %v471
        %v473 = vpop.xlane.xlu0 %472
        %v474 = vsel %vm394, %v456, 0.0
        %475 = vadd.xlane.f32.xlu0 %v474
        %v476 = vpop.xlane.xlu0 %475
        %v477 = vsel %vm394, %v457, 0.0
        %478 = vadd.xlane.f32.xlu0 %v477
        %v479 = vpop.xlane.xlu0 %478
        %v480 = vsel %vm394, %v458, 0.0
        %481 = vadd.xlane.f32.xlu0 %v480
        %v482 = vpop.xlane.xlu0 %481
        %v483 = vmul.f32 %v386, %v386
        %v484 = vmul.f32 %v387, %v387
        %v485 = vmul.f32 %v388, %v388
        %v486 = vmul.f32 %v389, %v389
        %v487 = vmul.f32 %v390, %v390
        %v488 = vmul.f32 %v391, %v391
        %v489 = vmul.f32 %v392, %v392
        %v490 = vmul.f32 %v393, %v393
        %v491 = vsel %vm394, %v483, 0.0
        %492 = vadd.xlane.f32.xlu0 %v491
        %v493 = vpop.xlane.xlu0 %492
        %v494 = vsel %vm394, %v484, 0.0
        %495 = vadd.xlane.f32.xlu0 %v494
        %v496 = vpop.xlane.xlu0 %495
        %v497 = vsel %vm394, %v485, 0.0
        %498 = vadd.xlane.f32.xlu0 %v497
        %v499 = vpop.xlane.xlu0 %498
        %v500 = vsel %vm394, %v486, 0.0
        %501 = vadd.xlane.f32.xlu0 %v500
        %v502 = vpop.xlane.xlu0 %501
        %v503 = vsel %vm394, %v487, 0.0
        %504 = vadd.xlane.f32.xlu0 %v503
        %v505 = vpop.xlane.xlu0 %504
        %v506 = vsel %vm394, %v488, 0.0
        %507 = vadd.xlane.f32.xlu0 %v506
        %v508 = vpop.xlane.xlu0 %507
        %v509 = vsel %vm394, %v489, 0.0
        %510 = vadd.xlane.f32.xlu0 %v509
        %v511 = vpop.xlane.xlu0 %510
        %v512 = vsel %vm394, %v490, 0.0
        %513 = vadd.xlane.f32.xlu0 %v512
        %v514 = vpop.xlane.xlu0 %513
        %v515 = vadd.f32 %v461, %v493
        %v516 = vadd.f32 %v464, %v496
        %v517 = vadd.f32 %v467, %v499
        %v518 = vadd.f32 %v470, %v502
        %v519 = vadd.f32 %v473, %v505
        %v520 = vadd.f32 %v476, %v508
        %v521 = vadd.f32 %v479, %v511
        %v522 = vadd.f32 %v482, %v514
        %v523 = vmul.f32 %v443, 0.0625
        %v524 = vmul.f32 %v444, 0.0625
        %v525 = vmul.f32 %v445, 0.0625
        %v526 = vmul.f32 %v446, 0.0625
        %v527 = vmul.f32 %v447, 0.0625
        %v528 = vmul.f32 %v448, 0.0625
        %v529 = vmul.f32 %v449, 0.0625
        %v530 = vmul.f32 %v450, 0.0625
        %v531 = vmul.f32 %v515, 0.0625
        %v532 = vmul.f32 %v516, 0.0625
        %v533 = vmul.f32 %v517, 0.0625
        %v534 = vmul.f32 %v518, 0.0625
        %v535 = vmul.f32 %v519, 0.0625
        %v536 = vmul.f32 %v520, 0.0625
        %v537 = vmul.f32 %v521, 0.0625
        %v538 = vmul.f32 %v522, 0.0625
        %v539 = vmul.f32 %v523, %v523
        %v540 = vmul.f32 %v524, %v524
        %v541 = vmul.f32 %v525, %v525
        %v542 = vmul.f32 %v526, %v526
        %v543 = vmul.f32 %v527, %v527
        %v544 = vmul.f32 %v528, %v528
        %v545 = vmul.f32 %v529, %v529
        %v546 = vmul.f32 %v530, %v530
        %v547 = vsub.f32 %v531, %v539
        %v548 = vsub.f32 %v532, %v540
        %v549 = vsub.f32 %v533, %v541
        %v550 = vsub.f32 %v534, %v542
        %v551 = vsub.f32 %v535, %v543
        %v552 = vsub.f32 %v536, %v544
        %v553 = vsub.f32 %v537, %v545
        %v554 = vsub.f32 %v538, %v546
        %v555 = vmax.f32 %v547, 0.0
        %v556 = vmax.f32 %v548, 0.0
        %v557 = vmax.f32 %v549, 0.0
        %v558 = vmax.f32 %v550, 0.0
        %v559 = vmax.f32 %v551, 0.0
        %v560 = vmax.f32 %v552, 0.0
        %v561 = vmax.f32 %v553, 0.0
        %v562 = vmax.f32 %v554, 0.0
        %v563 = vadd.f32 %v555, 1e-05
        %v564 = vadd.f32 %v556, 1e-05
        %v565 = vadd.f32 %v557, 1e-05
        %v566 = vadd.f32 %v558, 1e-05
        %v567 = vadd.f32 %v559, 1e-05
        %v568 = vadd.f32 %v560, 1e-05
        %v569 = vadd.f32 %v561, 1e-05
        %v570 = vadd.f32 %v562, 1e-05
        %v571 = vrsqrt.pop %v563
        %v572 = vmul.f32 %v571, %v563
        %v573 = vmul.f32 %v572, %v571
        %v574 = vmul.f32 0.5, %v573
        %v575 = vsub.f32 1.5, %v574
        %v576 = vmul.f32 %v571, %v575
        %vm577 = vweird.f32 %v563
        %vm578 = vweird.f32 %v571
        %vm579 = vmor %vm577, %vm578
        %v580 = vsel %vm579, %v571, %v576
        %v581 = vrsqrt.pop %v564
        %v582 = vmul.f32 %v581, %v564
        %v583 = vmul.f32 %v582, %v581
        %v584 = vmul.f32 0.5, %v583
        %v585 = vsub.f32 1.5, %v584
        %v586 = vmul.f32 %v581, %v585
        %vm587 = vweird.f32 %v564
        %vm588 = vweird.f32 %v581
        %vm589 = vmor %vm587, %vm588
        %v590 = vsel %vm589, %v581, %v586
        %v591 = vrsqrt.pop %v565
        %v592 = vmul.f32 %v591, %v565
        %v593 = vmul.f32 %v592, %v591
        %v594 = vmul.f32 0.5, %v593
        %v595 = vsub.f32 1.5, %v594
        %v596 = vmul.f32 %v591, %v595
        %vm597 = vweird.f32 %v565
        %vm598 = vweird.f32 %v591
        %vm599 = vmor %vm597, %vm598
        %v600 = vsel %vm599, %v591, %v596
        %v601 = vrsqrt.pop %v566
        %v602 = vmul.f32 %v601, %v566
        %v603 = vmul.f32 %v602, %v601
        %v604 = vmul.f32 0.5, %v603
        %v605 = vsub.f32 1.5, %v604
        %v606 = vmul.f32 %v601, %v605
        %vm607 = vweird.f32 %v566
        %vm608 = vweird.f32 %v601
        %vm609 = vmor %vm607, %vm608
        %v610 = vsel %vm609, %v601, %v606
        %v611 = vrsqrt.pop %v567
        %v612 = vmul.f32 %v611, %v567
        %v613 = vmul.f32 %v612, %v611
        %v614 = vmul.f32 0.5, %v613
        %v615 = vsub.f32 1.5, %v614
        %v616 = vmul.f32 %v611, %v615
        %vm617 = vweird.f32 %v567
        %vm618 = vweird.f32 %v611
        %vm619 = vmor %vm617, %vm618
        %v620 = vsel %vm619, %v611, %v616
        %v621 = vrsqrt.pop %v568
        %v622 = vmul.f32 %v621, %v568
        %v623 = vmul.f32 %v622, %v621
        %v624 = vmul.f32 0.5, %v623
        %v625 = vsub.f32 1.5, %v624
        %v626 = vmul.f32 %v621, %v625
        %vm627 = vweird.f32 %v568
        %vm628 = vweird.f32 %v621
        %vm629 = vmor %vm627, %vm628
        %v630 = vsel %vm629, %v621, %v626
        %v631 = vrsqrt.pop %v569
        %v632 = vmul.f32 %v631, %v569
        %v633 = vmul.f32 %v632, %v631
        %v634 = vmul.f32 0.5, %v633
        %v635 = vsub.f32 1.5, %v634
        %v636 = vmul.f32 %v631, %v635
        %vm637 = vweird.f32 %v569
        %vm638 = vweird.f32 %v631
        %vm639 = vmor %vm637, %vm638
        %v640 = vsel %vm639, %v631, %v636
        %v641 = vrsqrt.pop %v570
        %v642 = vmul.f32 %v641, %v570
        %v643 = vmul.f32 %v642, %v641
        %v644 = vmul.f32 0.5, %v643
        %v645 = vsub.f32 1.5, %v644
        %v646 = vmul.f32 %v641, %v645
        %vm647 = vweird.f32 %v570
        %vm648 = vweird.f32 %v641
        %vm649 = vmor %vm647, %vm648
        %v650 = vsel %vm649, %v641, %v646
        %v651 = vsub.f32 %v378, %v523
        %v652 = vsub.f32 %v379, %v524
        %v653 = vsub.f32 %v380, %v525
        %v654 = vsub.f32 %v381, %v526
        %v655 = vsub.f32 %v382, %v527
        %v656 = vsub.f32 %v383, %v528
        %v657 = vsub.f32 %v384, %v529
        %v658 = vsub.f32 %v385, %v530
        %v659 = vmul.f32 %v651, %v580
        %v660 = vmul.f32 %v652, %v590
        %v661 = vmul.f32 %v653, %v600
        %v662 = vmul.f32 %v654, %v610
        %v663 = vmul.f32 %v655, %v620
        %v664 = vmul.f32 %v656, %v630
        %v665 = vmul.f32 %v657, %v640
        %v666 = vmul.f32 %v658, %v650
        %v667 = vsub.f32 %v386, %v523
        %v668 = vsub.f32 %v387, %v524
        %v669 = vsub.f32 %v388, %v525
        %v670 = vsub.f32 %v389, %v526
        %v671 = vsub.f32 %v390, %v527
        %v672 = vsub.f32 %v391, %v528
        %v673 = vsub.f32 %v392, %v529
        %v674 = vsub.f32 %v393, %v530
        %v675 = vmul.f32 %v667, %v580
        %v676 = vmul.f32 %v668, %v590
        %v677 = vmul.f32 %v669, %v600
        %v678 = vmul.f32 %v670, %v610
        %v679 = vmul.f32 %v671, %v620
        %v680 = vmul.f32 %v672, %v630
        %v681 = vmul.f32 %v673, %v640
        %v682 = vmul.f32 %v674, %v650
        %v683 = vld [vmem:[%s2] sm:$0xf]
        %v684 = vld [vmem:[%s3] sm:$0xf]
        %v685 = vpack.c.bf16 %v660, %v659
        %v686 = vpack.c.bf16 %v662, %v661
        %v687 = vpack.c.bf16 %v664, %v663
        %v688 = vpack.c.bf16 %v666, %v665
        %v689 = vpack.c.bf16 %v676, %v675
        %v690 = vpack.c.bf16 %v678, %v677
        %v691 = vpack.c.bf16 %v680, %v679
        %v692 = vpack.c.bf16 %v682, %v681
        %v694 = vsel %vm394, %v689, 0
        %v697 = vsel %vm394, %v690, 0
        %v700 = vsel %vm394, %v691, 0
        %v703 = vsel %vm394, %v692, 0
        %vm705 = vcmask 1043456
        %v707 = vsel %vm705, %v684, 0
        %709 = vmatpush.bf16.msra.mxu0 0
        %710 = vmatpush.bf16.msra.mxu0 0
        %711 = vmatpush.bf16.msra.mxu0 0
        %712 = vmatpush.bf16.msra.mxu0 0
        %713 = vmatpush.bf16.msra.mxu0 0
        %714 = vmatpush.bf16.msra.mxu0 0
        %715 = vmatpush.bf16.msra.mxu0 0
        %716 = vmatpush.bf16.msra.mxu0 %v707
        %717 = vmatmul.bf16.gmra.mxu0 %v694
        %v718 = vpop.f32.mrf.mxu0
        %v719 = vadd.f32 0.0, %v718
        %v720 = vpop.f32.mrf.mxu0
        %v721 = vadd.f32 0.0, %v720
        %722 = vmatmul.bf16.gmra.mxu0 %v697
        %v723 = vpop.f32.mrf.mxu0
        %v724 = vadd.f32 0.0, %v723
        %v725 = vpop.f32.mrf.mxu0
        %v726 = vadd.f32 0.0, %v725
        %727 = vmatmul.bf16.gmra.mxu0 %v700
        %v728 = vpop.f32.mrf.mxu0
        %v729 = vadd.f32 0.0, %v728
        %v730 = vpop.f32.mrf.mxu0
        %v731 = vadd.f32 0.0, %v730
        %732 = vmatmul.bf16.gmra.mxu0 %v703
        %v733 = vpop.f32.mrf.mxu0
        %v734 = vadd.f32 0.0, %v733
        %v735 = vpop.f32.mrf.mxu0
        %v736 = vadd.f32 0.0, %v735
        %737 = vdwg.mxu0
        %v739 = vsel %vm394, %v685, 0
        %v742 = vsel %vm394, %v686, 0
        %v745 = vsel %vm394, %v687, 0
        %v748 = vsel %vm394, %v688, 0
        %v751 = vsel %vm705, %v683, 0
        %753 = vmatpush.bf16.msra.mxu0 0
        %754 = vmatpush.bf16.msra.mxu0 0
        %755 = vmatpush.bf16.msra.mxu0 0
        %756 = vmatpush.bf16.msra.mxu0 0
        %757 = vmatpush.bf16.msra.mxu0 0
        %758 = vmatpush.bf16.msra.mxu0 0
        %759 = vmatpush.bf16.msra.mxu0 0
        %760 = vmatpush.bf16.msra.mxu0 %v751
        %761 = vmatmul.bf16.gmra.mxu0 %v739
        %v762 = vpop.f32.mrf.mxu0
        %v763 = vadd.f32 %v719, %v762
        %v764 = vpop.f32.mrf.mxu0
        %v765 = vadd.f32 %v721, %v764
        %766 = vmatmul.bf16.gmra.mxu0 %v742
        %v767 = vpop.f32.mrf.mxu0
        %v768 = vadd.f32 %v724, %v767
        %v769 = vpop.f32.mrf.mxu0
        %v770 = vadd.f32 %v726, %v769
        %771 = vmatmul.bf16.gmra.mxu0 %v745
        %v772 = vpop.f32.mrf.mxu0
        %v773 = vadd.f32 %v729, %v772
        %v774 = vpop.f32.mrf.mxu0
        %v775 = vadd.f32 %v731, %v774
        %776 = vmatmul.bf16.gmra.mxu0 %v748
        %v777 = vpop.f32.mrf.mxu0
        %v778 = vadd.f32 %v734, %v777
        %v779 = vpop.f32.mrf.mxu0
        %v780 = vadd.f32 %v736, %v779
        %781 = vdwg.mxu0
        %v782 = vld [vmem:[%s4] sm:$0x1]
        %v784 = vperm.slane %v782, 0
        %v786 = vadd.f32 %v763, %v784
        %v787 = vadd.f32 %v765, %v784
        %v788 = vadd.f32 %v768, %v784
        %v789 = vadd.f32 %v770, %v784
        %v790 = vadd.f32 %v773, %v784
        %v791 = vadd.f32 %v775, %v784
        %v792 = vadd.f32 %v778, %v784
        %v793 = vadd.f32 %v780, %v784
        %794 = vst [vmem:[%s373] sm:$0xff] %v786
        %795 = vst [vmem:[%s373 + $0x8] sm:$0xff] %v787
        %796 = vst [vmem:[%s373 + $0x10] sm:$0xff] %v788
        %797 = vst [vmem:[%s373 + $0x18] sm:$0xff] %v789
        %798 = vst [vmem:[%s373 + $0x20] sm:$0xff] %v790
        %799 = vst [vmem:[%s373 + $0x28] sm:$0xff] %v791
        %800 = vst [vmem:[%s373 + $0x30] sm:$0xff] %v792
        %801 = vst [vmem:[%s373 + $0x38] sm:$0xff] %v793
        %s802 = sand.u32 %s142, 1
        %s803 = scalar_lea.sflag [#allocation5], %s802
        %s804 = sand.u32 %s142, 1
        %s805 = smul.addr %s804, 64
        %s806 = scalar_lea.vmem [#allocation4], %s805
        // Predicated region
        $region117: #{tpu_custom_call.1} parent=107 // pred_check
          %p807 = pneg %p152
        $region118: #{tpu_custom_call.1} parent=107 // pred_check_branch
          %809 = sbr.rel (%p807) target = $region120
        $region119: #{tpu_custom_call.1} parent=107 // pred_region
          %s810 = smul.u32 8, %s19
          %812 = vsyncadd %s803, 0
          %s813 = smul.addr %s810, 8
          %s814 = scalar_lea.hbm %s5, %s813
          %s815 = sshll.u32 %s806, 4
          %s816 = int_to_ptr.vmem [resolvable:$true] %s815
          %s817 = sshll.u32 %s814, 4
          %s818 = int_to_ptr.hbm [resolvable:$true] %s817
          %823 = dma.vmem_to_hbm [thread:$0]  %s816, 1024, %s818, %s803, 128, 128, 8
        $region120: #{tpu_custom_call.1} parent=107 // pred_fallthru
          _
      $region108: #{tpu_custom_call.1} parent=5 // pred_fallthru
        _
      %p824 = scmp.le.s32.totalorder 2, %s14
      // Predicated region
      $region121: #{tpu_custom_call.1} parent=5 // pred_check
        %p825 = pneg %p824
      $region122: #{tpu_custom_call.1} parent=5 // pred_check_branch
        %827 = sbr.rel (%p825) target = $region124
      $region123: #{tpu_custom_call.1} parent=5 // pred_region
        %s828 = ssub.s32 %s14, 2
        // Predicated region
        $region125: #{tpu_custom_call.1} parent=123 // pred_check
          %p829 = pneg %p158
        $region126: #{tpu_custom_call.1} parent=123 // pred_check_branch
          %831 = sbr.rel (%p829) target = $region128
        $region127: #{tpu_custom_call.1} parent=123 // pred_region
          %s832 = sand.u32 %s143, 1
          %s833 = scalar_lea.sflag [#allocation5], %s832
          %s834 = sand.u32 %s143, 1
          %s835 = smul.addr %s834, 64
          %s836 = scalar_lea.vmem [#allocation4], %s835
          %838 = dma.done %s833, 1024
        $region128: #{tpu_custom_call.1} parent=123 // pred_fallthru
          _
      $region124: #{tpu_custom_call.1} parent=5 // pred_fallthru
        _
    $region6: #{tpu_custom_call.1} parent=1 // loop_footer
      %s18 = sadd.s32 1, %s14
    $region7: #{tpu_custom_call.1} parent=1 // loop_footer_branch
      %13 = sbr.rel target = $region3
    $region8: #{tpu_custom_call.1} parent=1 // loop_exit
      _
    %839 = vsyncpa [#allocation5], 1
    %s840 = scalar_lea.sflag [#allocation5], 1
    %841 = vsyncpa %s840, 1

</llo_original>
